<compile_context>
chip_gen: v5e
topology: v5e:2x2
jax: 0.10.0
libtpu: 0.0.40
codegen_flags: <defaults>
</compile_context>

<pallas_src>
import jax
import jax.numpy as jnp
from jax.experimental import pallas as pl
from jax.experimental.pallas import tpu as pltpu


# ----------------------------------------------------------------------------
# Helpers
# ----------------------------------------------------------------------------
def _round_up(n, m):
    return n + (-n % m)


def _vmem_budget_and_limit():
    """(tile-selection budget, vmem_limit_bytes) derived from the chip."""
    try:
        cap = int(pltpu.get_tpu_info().vmem_capacity_bytes)
    except Exception:
        cap = 64 * 1024 * 1024       # conservative: v7x per-TensorCore VMEM
    return int(cap * 0.70), int(cap * 0.85)


def _default_batch_shards():
    """>=2 batch tiles on dual-TensorCore chips (v7x) so the 'parallel'
    batch axis does not leave a core idle.  Best-effort detection; a wrong
    guess only costs one extra weight re-stream."""
    try:
        kind = jax.devices()[0].device_kind.lower()
    except Exception:
        return 1
    return 2 if "7" in kind else 1


def _select_tiles(B, D, Op, *, w_bytes, h_bytes, vmem_budget, batch_shards=1):
    """Pick (tm, tn, Bp) so the double-buffered working set fits VMEM."""
    tn = min(Op, 512)                      # lane-dense; divides Op by design
    Bp0 = _round_up(B, 8)
    tm = min(Bp0, 512)                     # tm cap raised to 512 (v5e/v6e win)
    if tm == Bp0 and batch_shards > 1 and Bp0 >= 8 * batch_shards:
        # Split a single batch tile so the "parallel" axis has >= shards tiles.
        tm = _round_up((Bp0 + batch_shards - 1) // batch_shards, 8)

    def usage(tm_, tn_):
        return (4 * tm_ * D * 4            # x + y, double-buffered, f32
                + tm_ * D * h_bytes        # hidden scratch
                + 2 * D * tn_ * w_bytes    # W stream, double-buffered
                + 2 * tm_ * tn_ * 4        # out, double-buffered, f32
                + 2 * tn_ * 4)             # bias

    while usage(tm, tn) > vmem_budget:
        if tm > 128:
            tm = _round_up(tm // 2, 8)
        elif tn > 128:
            tn = 128                        # 128 always divides Op
        elif tm > 8:
            tm = _round_up(tm // 2, 8)
        else:
            break

    Bp = _round_up(B, tm)
    return tm, tn, Bp


# ----------------------------------------------------------------------------
# Kernel bodies
# ----------------------------------------------------------------------------
def _fused_hidden(x, y):
    """softmax-ratio blend, all in f32.  NaN iff both exps underflow for an
    element (0/0) -- same failure mode as the PyTorch reference."""
    x = x.astype(jnp.float32)
    y = y.astype(jnp.float32)
    ex = jnp.exp(x - jnp.max(x, axis=-1, keepdims=True))
    ey = jnp.exp(y - jnp.max(y, axis=-1, keepdims=True))
    sx = jnp.sum(ex, axis=-1, keepdims=True)
    sy = jnp.sum(ey, axis=-1, keepdims=True)
    p = ex * sy
    q = ey * sx
    # Exact divide (see header): one divide per element, once per batch tile.
    return (p * x + q * y) / (p + q)


def _cmml_kernel_multi(x_ref, y_ref, w_ref, b_ref, out_ref, hidden_ref):
    # Hidden features computed once per batch tile (j == 0), cached in VMEM
    # and reused for every output tile.  Requires the j axis to execute
    # sequentially per core ("arbitrary") -- do NOT mark it "parallel".
    @pl.when(pl.program_id(1) == 0)
    def _():
        h = _fused_hidden(x_ref[...], y_ref[...])
        hidden_ref[...] = h.astype(hidden_ref.dtype)

    acc = jnp.dot(hidden_ref[...], w_ref[...],
                  preferred_element_type=jnp.float32)
    out_ref[...] = (acc + b_ref[...]).astype(out_ref.dtype)


def _cmml_kernel_single(x_ref, y_ref, w_ref, b_ref, out_ref):
    # Single-output-tile fast path: no scratch round-trip.
    h = _fused_hidden(x_ref[...], y_ref[...]).astype(w_ref.dtype)
    acc = jnp.dot(h, w_ref[...], preferred_element_type=jnp.float32)
    out_ref[...] = (acc + b_ref[...]).astype(out_ref.dtype)


# ----------------------------------------------------------------------------
# Parameter prep (done ONCE, out of the per-call path)
# ----------------------------------------------------------------------------
def prepare_fc_params(weight, bias, *, matmul_dtype=jnp.bfloat16):
    """weight: (O, D) torch layout; bias: (O,).  Returns (w_t, b2, O) where
    w_t is the (D, Op) lane-padded matmul-dtype weight and b2 the (1, Op)
    f32 bias.  Call once at init; re-use across forward calls."""
    O, D = weight.shape
    Op = _round_up(O, 128) if O <= 512 else _round_up(O, 512)
    w_t = jnp.asarray(weight, jnp.float32).T.astype(matmul_dtype)   # (D, O)
    b2 = jnp.asarray(bias, jnp.float32).reshape(1, O)
    if Op != O:
        w_t = jnp.pad(w_t, ((0, 0), (0, Op - O)))
        b2 = jnp.pad(b2, ((0, 0), (0, Op - O)))
    return w_t, b2, int(O)


# ----------------------------------------------------------------------------
# Forward wrapper
# ----------------------------------------------------------------------------
def cmml_normal_fusion(x, y, w_t, b2, out_dim, *, num_batch_shards=None):
    """x, y: (B, D) f32; w_t/b2/out_dim from prepare_fc_params.
    Returns (x, y, out) exactly like CMML_normal_Fusion.forward."""
    B, D = x.shape
    Dw, Op = w_t.shape
    assert Dw == D, f"weight feature dim {Dw} != input dim {D}"

    if num_batch_shards is None:
        num_batch_shards = _default_batch_shards()

    w_bytes = jnp.dtype(w_t.dtype).itemsize
    budget, vmem_limit = _vmem_budget_and_limit()
    tm, tn, Bp = _select_tiles(B, D, Op, w_bytes=w_bytes, h_bytes=w_bytes,
                               vmem_budget=budget,
                               batch_shards=num_batch_shards)

    xk = jnp.pad(x, ((0, Bp - B), (0, 0))) if Bp != B else x
    yk = jnp.pad(y, ((0, Bp - B), (0, 0))) if Bp != B else y

    grid = (Bp // tm, Op // tn)
    single_out_tile = grid[1] == 1
    kernel = _cmml_kernel_single if single_out_tile else _cmml_kernel_multi
    scratch = () if single_out_tile else (pltpu.VMEM((tm, D), w_t.dtype),)

    cost = pl.CostEstimate(
        flops=int(2 * Bp * D * Op + 12 * Bp * D),
        transcendentals=int(2 * Bp * D),
        bytes_accessed=int(2 * Bp * D * 4 + grid[0] * D * Op * w_bytes
                           + Bp * Op * 4 + Op * 4),
    )

    out_padded = pl.pallas_call(
        kernel,
        out_shape=jax.ShapeDtypeStruct((Bp, Op), x.dtype),
        grid=grid,
        in_specs=[
            pl.BlockSpec((tm, D), lambda i, j: (i, 0)),   # x (constant over j)
            pl.BlockSpec((tm, D), lambda i, j: (i, 0)),   # y (constant over j)
            pl.BlockSpec((D, tn), lambda i, j: (0, j)),   # W (streamed over j)
            pl.BlockSpec((1, tn), lambda i, j: (0, j)),   # bias (f32)
        ],
        out_specs=pl.BlockSpec((tm, tn), lambda i, j: (i, j)),
        scratch_shapes=scratch,
        compiler_params=pltpu.CompilerParams(
            # batch axis parallel (v7x dual-TC sharding); output axis MUST be
            # arbitrary (hidden scratch is written only at j == 0).
            dimension_semantics=("parallel", "arbitrary"),
            vmem_limit_bytes=vmem_limit,
        ),
        cost_estimate=cost,
    )(xk, yk, w_t, b2)

    out = out_padded[:B, :out_dim]
    # The module returns the untouched inputs alongside the fused projection.
    return x, y, out


# ----------------------------------------------------------------------------
# Demo / self-test
# ----------------------------------------------------------------------------
if __name__ == "__main__":
    # Module defaults: input_dim=512, output_dim=100; small batch.
    B, D, O = 8, 512, 100

    key = jax.random.PRNGKey(0)
    kx, ky, kw, kb = jax.random.split(key, 4)

    x = jax.random.normal(kx, (B, D), dtype=jnp.float32)
    y = jax.random.normal(ky, (B, D), dtype=jnp.float32)

    # Deterministic nn.Linear-style init: U(-1/sqrt(D), 1/sqrt(D)).
    bound = 1.0 / (D ** 0.5)
    weight = jax.random.uniform(kw, (O, D), minval=-bound, maxval=bound,
                                dtype=jnp.float32)          # torch (out, in)
    bias = jax.random.uniform(kb, (O,), minval=-bound, maxval=bound,
                              dtype=jnp.float32)

    # One-time init-path prep (transpose / pad / cast hoisted out of forward).
    w_t, b2, out_dim = prepare_fc_params(weight, bias)

    x_out, y_out, out = cmml_normal_fusion(x, y, w_t, b2, out_dim)
    jax.block_until_ready(out)

    # Pure-JAX f32 reference (exact module semantics).
    a = jax.nn.softmax(x, axis=1)
    v = jax.nn.softmax(y, axis=1)
    s = a + v
    h = (a / s) * x + (v / s) * y
    ref_f32 = h @ weight.T + bias

    # Reference with the same bf16 quantization of the matmul operands
    # (kernel does bf16 x bf16 -> f32-accumulate on the MXU).
    h_q = h.astype(jnp.bfloat16).astype(jnp.float32)
    w_q = weight.astype(jnp.bfloat16).astype(jnp.float32)
    ref_q = h_q @ w_q.T + bias

    assert out.shape == (B, O)
    err_q = float(jnp.max(jnp.abs(out - ref_q)))
    err_f = float(jnp.max(jnp.abs(out - ref_f32)))
    assert jnp.allclose(out, ref_q, atol=1e-2, rtol=1e-2), \
        f"mismatch vs bf16-quantized reference (max abs err {err_q:.3e})"
    assert jnp.allclose(out, ref_f32, atol=3e-2, rtol=3e-2), \
        f"mismatch vs f32 reference (max abs err {err_f:.3e})"
    assert jnp.array_equal(x_out, x) and jnp.array_equal(y_out, y)

    print("KERNEL_OK")
</pallas_src>

<mosaic_0001>
module attributes {stable_mosaic.version = 11 : i64} {
  func.func @_cmml_kernel_single(%arg0: i32, %arg1: i32, %arg2: memref<8x512xf32, #tpu.memory_space<vmem>>, %arg3: memref<8x512xf32, #tpu.memory_space<vmem>>, %arg4: memref<512x128xbf16, #tpu.memory_space<vmem>>, %arg5: memref<1x128xf32, #tpu.memory_space<vmem>>, %arg6: memref<8x128xf32, #tpu.memory_space<vmem>>) attributes {dimension_semantics = [#tpu.dimension_semantics<parallel>, #tpu.dimension_semantics<arbitrary>], iteration_bounds = array<i64: 1, 1>, scalar_prefetch = 0 : i64, scratch_operands = 0 : i64, tpu.core_type = #tpu.core_type<tc>, window_params = [{transform_indices = @transform_0, window_bounds = array<i64: 8, 512>}, {transform_indices = @transform_1, window_bounds = array<i64: 8, 512>}, {transform_indices = @transform_2, window_bounds = array<i64: 512, 128>}, {transform_indices = @transform_3, window_bounds = array<i64: 1, 128>}, {transform_indices = @transform_4, window_bounds = array<i64: 8, 128>}]} {
    %c0 = arith.constant 0 : index
    %c0_0 = arith.constant 0 : index
    %0 = vector.load %arg2[%c0, %c0_0] : memref<8x512xf32, #tpu.memory_space<vmem>>, vector<8x512xf32>
    %c0_1 = arith.constant 0 : index
    %c0_2 = arith.constant 0 : index
    %1 = vector.load %arg3[%c0_1, %c0_2] : memref<8x512xf32, #tpu.memory_space<vmem>>, vector<8x512xf32>
    %cst = arith.constant dense<0xFF800000> : vector<8xf32>
    %2 = vector.multi_reduction <maximumf>, %0, %cst [1] : vector<8x512xf32> to vector<8xf32>
    %3 = vector.shape_cast %2 : vector<8xf32> to vector<8x1xf32>
    %4 = vector.broadcast %3 : vector<8x1xf32> to vector<8x512xf32>
    %5 = arith.subf %0, %4 : vector<8x512xf32>
    %6 = math.exp %5 : vector<8x512xf32>
    %cst_3 = arith.constant dense<0xFF800000> : vector<8xf32>
    %7 = vector.multi_reduction <maximumf>, %1, %cst_3 [1] : vector<8x512xf32> to vector<8xf32>
    %8 = vector.shape_cast %7 : vector<8xf32> to vector<8x1xf32>
    %9 = vector.broadcast %8 : vector<8x1xf32> to vector<8x512xf32>
    %10 = arith.subf %1, %9 : vector<8x512xf32>
    %11 = math.exp %10 : vector<8x512xf32>
    %cst_4 = arith.constant dense<0.000000e+00> : vector<8xf32>
    %12 = vector.multi_reduction <add>, %6, %cst_4 [1] : vector<8x512xf32> to vector<8xf32>
    %13 = vector.shape_cast %12 : vector<8xf32> to vector<8x1xf32>
    %cst_5 = arith.constant dense<0.000000e+00> : vector<8xf32>
    %14 = vector.multi_reduction <add>, %11, %cst_5 [1] : vector<8x512xf32> to vector<8xf32>
    %15 = vector.shape_cast %14 : vector<8xf32> to vector<8x1xf32>
    %16 = vector.broadcast %15 : vector<8x1xf32> to vector<8x512xf32>
    %17 = arith.mulf %6, %16 : vector<8x512xf32>
    %18 = vector.broadcast %13 : vector<8x1xf32> to vector<8x512xf32>
    %19 = arith.mulf %11, %18 : vector<8x512xf32>
    %20 = arith.mulf %17, %0 : vector<8x512xf32>
    %21 = arith.mulf %19, %1 : vector<8x512xf32>
    %22 = arith.addf %20, %21 : vector<8x512xf32>
    %23 = arith.addf %17, %19 : vector<8x512xf32>
    %24 = arith.divf %22, %23 : vector<8x512xf32>
    %25 = arith.truncf %24 : vector<8x512xf32> to vector<8x512xbf16>
    %c0_6 = arith.constant 0 : index
    %c0_7 = arith.constant 0 : index
    %26 = vector.load %arg4[%c0_6, %c0_7] : memref<512x128xbf16, #tpu.memory_space<vmem>>, vector<512x128xbf16>
    %cst_8 = arith.constant dense<0.000000e+00> : vector<8x128xf32>
    %27 = tpu.matmul %25, %26, %cst_8 {dimension_numbers = #tpu.dot_dimension_numbers<[1], [0], [0], [1], [0, 0, 1, 1], [], []>} : vector<8x512xbf16>, vector<512x128xbf16>, vector<8x128xf32> -> vector<8x128xf32>
    %c0_9 = arith.constant 0 : index
    %c0_10 = arith.constant 0 : index
    %28 = vector.load %arg5[%c0_9, %c0_10] : memref<1x128xf32, #tpu.memory_space<vmem>>, vector<1x128xf32>
    %29 = vector.broadcast %28 : vector<1x128xf32> to vector<8x128xf32>
    %30 = arith.addf %27, %29 : vector<8x128xf32>
    %c0_11 = arith.constant 0 : index
    %c0_12 = arith.constant 0 : index
    %31 = vector.load %arg6[%c0_11, %c0_12] : memref<8x128xf32, #tpu.memory_space<vmem>>, vector<8x128xf32>
    tpu.vector_store %arg6[%c0_11, %c0_12], %30 {strides = array<i32>} : memref<8x128xf32, #tpu.memory_space<vmem>>, vector<8x128xf32>,
    return
  }
  func.func @transform_0(%arg0: i32, %arg1: i32) -> (i32, i32) {
    %c0_i32 = arith.constant 0 : i32
    %c0_i32_0 = arith.constant 0 : i32
    return %arg0, %c0_i32 : i32, i32
  }
  func.func @transform_1(%arg0: i32, %arg1: i32) -> (i32, i32) {
    %c0_i32 = arith.constant 0 : i32
    %c0_i32_0 = arith.constant 0 : i32
    return %arg0, %c0_i32 : i32, i32
  }
  func.func @transform_2(%arg0: i32, %arg1: i32) -> (i32, i32) {
    %c0_i32 = arith.constant 0 : i32
    %c0_i32_0 = arith.constant 0 : i32
    return %c0_i32, %arg1 : i32, i32
  }
  func.func @transform_3(%arg0: i32, %arg1: i32) -> (i32, i32) {
    %c0_i32 = arith.constant 0 : i32
    %c0_i32_0 = arith.constant 0 : i32
    return %c0_i32, %arg1 : i32, i32
  }
  func.func @transform_4(%arg0: i32, %arg1: i32) -> (i32, i32) {
    %c0_i32 = arith.constant 0 : i32
    return %arg0, %arg1 : i32, i32
  }
}

</mosaic_0001>

<llo_original>
// kernel: tpu_custom_call.1
$region0: #{tpu_custom_call.1}
  #allocation0 [shape = 'u32[]', space=smem, size = 0x4, offset = 0x4, fixed_abs, tag = 'smem constant byte address 0x4 - core index']
  #allocation1 [shape = 'u32[72,128]{1,0:T(1,128)}', space=vmem, size = 0x9000, scoped, tag = 'internal scratch']
  %s0 = inlined_call_operand.hbm [shape: f32[8,512], index: 0, kind: input, shape index: {}]
  %s1 = inlined_call_operand.hbm [shape: f32[8,512], index: 1, kind: input, shape index: {}]
  %s2 = inlined_call_operand.hbm [shape: bf16[512,128], index: 2, kind: input, shape index: {}]
  %s3 = inlined_call_operand.vmem [shape: f32[1,128], index: 3, kind: input, shape index: {}]
  %s4 = inlined_call_operand.hbm [shape: f32[8,128], index: 4, kind: output, shape index: {}]
  %s5 = sld [smem:[#allocation0]]
  $region38: #{tpu_custom_call.1} parent=0
    _
  %s7 = ssub.s32 1, %s5
  %s8 = scalar_select 0, %s7, %s5
  $region1: #{tpu_custom_call.1} parent=0
    #allocation2 [shape = 'u8[16384]{0}', space=vmem, size = 0x4000, scoped, tag = 'input window, operand 0, single buffered']
    #allocation3 [shape = 's32[1]{0}', space=sflag, size = 0x4, scoped, tag = 'scoped memory for tpu_custom_call.1']
    #allocation4 [shape = 's32[1]{0}', space=sflag, size = 0x4, scoped, tag = 'scoped memory for tpu_custom_call.1']
    #allocation5 [shape = 'u8[16384]{0}', space=vmem, size = 0x4000, scoped, tag = 'input window, operand 1, single buffered']
    #allocation6 [shape = 's32[1]{0}', space=sflag, size = 0x4, scoped, tag = 'scoped memory for tpu_custom_call.1']
    #allocation7 [shape = 'u8[131072]{0}', space=vmem, size = 0x20000, scoped, tag = 'input window, operand 2, single buffered']
    #allocation8 [shape = 'u8[4096]{0}', space=vmem, size = 0x1000, scoped, tag = 'output window, operand 0, single buffered']
    %9 = vsyncpa [#allocation3], 0
    %10 = vsyncpa [#allocation6], 0
    %11 = vsyncpa [#allocation4], 0
    // Predicated region
    $region2: #{tpu_custom_call.1} parent=1 // pred_check
      _
    $region3: #{tpu_custom_call.1} parent=1 // pred_check_branch
      %13 = sbr.rel (0) target = $region5
    $region4: #{tpu_custom_call.1} parent=1 // pred_region
      %15 = vsyncadd [#allocation3], 0
      %s17 = sshll.u32 %s0, 4
      %s18 = int_to_ptr.hbm [resolvable:$true] %s17
      %s19 = sshll.u32 [#allocation2], 4
      %s20 = int_to_ptr.vmem [resolvable:$true] %s19
      %22 = dma.hbm_to_vmem [thread:$0]  %s18, 512, %s20, [#allocation3]
    $region5: #{tpu_custom_call.1} parent=1 // pred_fallthru
      _
    // Predicated region
    $region6: #{tpu_custom_call.1} parent=1 // pred_check
      _
    $region7: #{tpu_custom_call.1} parent=1 // pred_check_branch
      %24 = sbr.rel (0) target = $region9
    $region8: #{tpu_custom_call.1} parent=1 // pred_region
      %26 = vsyncadd [#allocation6], 0
      %s28 = sshll.u32 %s1, 4
      %s29 = int_to_ptr.hbm [resolvable:$true] %s28
      %s30 = sshll.u32 [#allocation5], 4
      %s31 = int_to_ptr.vmem [resolvable:$true] %s30
      %33 = dma.hbm_to_vmem [thread:$0]  %s29, 512, %s31, [#allocation6]
    $region9: #{tpu_custom_call.1} parent=1 // pred_fallthru
      _
    // Predicated region
    $region10: #{tpu_custom_call.1} parent=1 // pred_check
      _
    $region11: #{tpu_custom_call.1} parent=1 // pred_check_branch
      %35 = sbr.rel (0) target = $region13
    $region12: #{tpu_custom_call.1} parent=1 // pred_region
      %37 = vsyncadd [#allocation6], 0
      %s38 = sshll.u32 %s2, 4
      %s39 = int_to_ptr.hbm [resolvable:$true] %s38
      %s40 = sshll.u32 [#allocation7], 4
      %s41 = int_to_ptr.vmem [resolvable:$true] %s40
      %46 = dma.hbm_to_vmem [thread:$0]  %s39, 4096, %s41, [#allocation6], 64, 64, 4
    $region13: #{tpu_custom_call.1} parent=1 // pred_fallthru
      _
    // Predicated region
    $region14: #{tpu_custom_call.1} parent=1 // pred_check
      _
    $region15: #{tpu_custom_call.1} parent=1 // pred_check_branch
      %48 = sbr.rel (0) target = $region17
    $region16: #{tpu_custom_call.1} parent=1 // pred_region
      _
    $region17: #{tpu_custom_call.1} parent=1 // pred_fallthru
      _
    // Predicated region
    $region18: #{tpu_custom_call.1} parent=1 // pred_check
      _
    $region19: #{tpu_custom_call.1} parent=1 // pred_check_branch
      %50 = sbr.rel (0) target = $region21
    $region20: #{tpu_custom_call.1} parent=1 // pred_region
      %52 = dma.done [#allocation3], 512
    $region21: #{tpu_custom_call.1} parent=1 // pred_fallthru
      _
    // Predicated region
    $region22: #{tpu_custom_call.1} parent=1 // pred_check
      _
    $region23: #{tpu_custom_call.1} parent=1 // pred_check_branch
      %54 = sbr.rel (0) target = $region25
    $region24: #{tpu_custom_call.1} parent=1 // pred_region
      %56 = dma.done [#allocation6], 512
    $region25: #{tpu_custom_call.1} parent=1 // pred_fallthru
      _
    // Predicated region
    $region26: #{tpu_custom_call.1} parent=1 // pred_check
      _
    $region27: #{tpu_custom_call.1} parent=1 // pred_check_branch
      %58 = sbr.rel (0) target = $region29
    $region28: #{tpu_custom_call.1} parent=1 // pred_region
      %60 = dma.done [#allocation6], 4096
    $region29: #{tpu_custom_call.1} parent=1 // pred_fallthru
      _
    %v61 = vld [vmem:[#allocation2] sm:$0xff]
    %v62 = vld [vmem:[#allocation2 + $0x8] sm:$0xff]
    %v63 = vld [vmem:[#allocation2 + $0x10] sm:$0xff]
    %v64 = vld [vmem:[#allocation2 + $0x18] sm:$0xff]
    %v65 = vld [vmem:[#allocation5] sm:$0xff]
    %v66 = vld [vmem:[#allocation5 + $0x8] sm:$0xff]
    %v67 = vld [vmem:[#allocation5 + $0x10] sm:$0xff]
    %v68 = vld [vmem:[#allocation5 + $0x18] sm:$0xff]
    %v69 = vmax.f32 %v61, %v62
    %v70 = vmax.f32 %v63, %v64
    %v71 = vmax.f32 %v69, %v70
    %72 = vmax.xlane.f32.xlu0 %v71
    %v73 = vpop.xlane.xlu0 %72
    %v74 = vsub.f32 %v61, %v73
    %v75 = vsub.f32 %v62, %v73
    %v76 = vsub.f32 %v63, %v73
    %v77 = vsub.f32 %v64, %v73
    %v78 = vmul.f32 %v74, 1.442695
    %v79 = vpow.pop %v78
    %v80 = vmul.f32 %v75, 1.442695
    %v81 = vpow.pop %v80
    %v82 = vmul.f32 %v76, 1.442695
    %v83 = vpow.pop %v82
    %v84 = vmul.f32 %v77, 1.442695
    %v85 = vpow.pop %v84
    %v86 = vmax.f32 %v65, %v66
    %v87 = vmax.f32 %v67, %v68
    %v88 = vmax.f32 %v86, %v87
    %89 = vmax.xlane.f32.xlu0 %v88
    %v90 = vpop.xlane.xlu0 %89
    %v91 = vsub.f32 %v65, %v90
    %v92 = vsub.f32 %v66, %v90
    %v93 = vsub.f32 %v67, %v90
    %v94 = vsub.f32 %v68, %v90
    %v95 = vmul.f32 %v91, 1.442695
    %v96 = vpow.pop %v95
    %v97 = vmul.f32 %v92, 1.442695
    %v98 = vpow.pop %v97
    %v99 = vmul.f32 %v93, 1.442695
    %v100 = vpow.pop %v99
    %v101 = vmul.f32 %v94, 1.442695
    %v102 = vpow.pop %v101
    %v103 = vadd.f32 %v79, %v81
    %v104 = vadd.f32 %v103, %v83
    %v105 = vadd.f32 %v104, %v85
    %106 = vadd.xlane.f32.xlu0 %v105
    %v107 = vpop.xlane.xlu0 %106
    %v108 = vadd.f32 %v96, %v98
    %v109 = vadd.f32 %v108, %v100
    %v110 = vadd.f32 %v109, %v102
    %111 = vadd.xlane.f32.xlu0 %v110
    %v112 = vpop.xlane.xlu0 %111
    %v113 = vmul.f32 %v79, %v112
    %v114 = vmul.f32 %v81, %v112
    %v115 = vmul.f32 %v83, %v112
    %v116 = vmul.f32 %v85, %v112
    %v117 = vmul.f32 %v96, %v107
    %v118 = vmul.f32 %v98, %v107
    %v119 = vmul.f32 %v100, %v107
    %v120 = vmul.f32 %v102, %v107
    %v121 = vmul.f32 %v113, %v61
    %v122 = vmul.f32 %v114, %v62
    %v123 = vmul.f32 %v115, %v63
    %v124 = vmul.f32 %v116, %v64
    %v125 = vmul.f32 %v117, %v65
    %v126 = vmul.f32 %v118, %v66
    %v127 = vmul.f32 %v119, %v67
    %v128 = vmul.f32 %v120, %v68
    %v129 = vadd.f32 %v121, %v125
    %v130 = vadd.f32 %v122, %v126
    %v131 = vadd.f32 %v123, %v127
    %v132 = vadd.f32 %v124, %v128
    %v133 = vadd.f32 %v113, %v117
    %v134 = vadd.f32 %v114, %v118
    %v135 = vadd.f32 %v115, %v119
    %v136 = vadd.f32 %v116, %v120
    %v137 = vrcp.pop %v133
    %v138 = vmul.f32 %v133, %v137
    %v139 = vsub.f32 1.0, %v138
    %v140 = vmul.f32 %v137, %v139
    %v141 = vadd.f32 %v137, %v140
    %vm142 = vweird.f32 %v133
    %vm143 = vweird.f32 %v137
    %vm144 = vmor %vm142, %vm143
    %v145 = vsel %vm144, %v137, %v141
    %v146 = vand.u32 2147483647, %v133
    %vm147 = vcmp.eq.f32.partialorder %v146, 8.507059e+37
    %v148 = vand.u32 %v133, 2147483648
    %v149 = vor.u32 1.1754944e-38, %v148
    %v150 = vsel %vm147, %v149, %v145
    %v151 = vmul.f32 %v129, %v150
    %v152 = vrcp.pop %v134
    %v153 = vmul.f32 %v134, %v152
    %v154 = vsub.f32 1.0, %v153
    %v155 = vmul.f32 %v152, %v154
    %v156 = vadd.f32 %v152, %v155
    %vm157 = vweird.f32 %v134
    %vm158 = vweird.f32 %v152
    %vm159 = vmor %vm157, %vm158
    %v160 = vsel %vm159, %v152, %v156
    %v161 = vand.u32 2147483647, %v134
    %vm162 = vcmp.eq.f32.partialorder %v161, 8.507059e+37
    %v163 = vand.u32 %v134, 2147483648
    %v164 = vor.u32 1.1754944e-38, %v163
    %v165 = vsel %vm162, %v164, %v160
    %v166 = vmul.f32 %v130, %v165
    %v167 = vrcp.pop %v135
    %v168 = vmul.f32 %v135, %v167
    %v169 = vsub.f32 1.0, %v168
    %v170 = vmul.f32 %v167, %v169
    %v171 = vadd.f32 %v167, %v170
    %vm172 = vweird.f32 %v135
    %vm173 = vweird.f32 %v167
    %vm174 = vmor %vm172, %vm173
    %v175 = vsel %vm174, %v167, %v171
    %v176 = vand.u32 2147483647, %v135
    %vm177 = vcmp.eq.f32.partialorder %v176, 8.507059e+37
    %v178 = vand.u32 %v135, 2147483648
    %v179 = vor.u32 1.1754944e-38, %v178
    %v180 = vsel %vm177, %v179, %v175
    %v181 = vmul.f32 %v131, %v180
    %v182 = vrcp.pop %v136
    %v183 = vmul.f32 %v136, %v182
    %v184 = vsub.f32 1.0, %v183
    %v185 = vmul.f32 %v182, %v184
    %v186 = vadd.f32 %v182, %v185
    %vm187 = vweird.f32 %v136
    %vm188 = vweird.f32 %v182
    %vm189 = vmor %vm187, %vm188
    %v190 = vsel %vm189, %v182, %v186
    %v191 = vand.u32 2147483647, %v136
    %vm192 = vcmp.eq.f32.partialorder %v191, 8.507059e+37
    %v193 = vand.u32 %v136, 2147483648
    %v194 = vor.u32 1.1754944e-38, %v193
    %v195 = vsel %vm192, %v194, %v190
    %v196 = vmul.f32 %v132, %v195
    %v197 = vpack.c.bf16 %v151, %v151
    %v198 = vpack.c.bf16 %v166, %v166
    %v199 = vpack.c.bf16 %v181, %v181
    %v200 = vpack.c.bf16 %v196, %v196
    %v201 = vld [vmem:[#allocation7] sm:$0xf]
    %v202 = vld [vmem:[#allocation7 + $0x4] sm:$0xf]
    %v203 = vld [vmem:[#allocation7 + $0x8] sm:$0xf]
    %v204 = vld [vmem:[#allocation7 + $0xc] sm:$0xf]
    %v205 = vld [vmem:[#allocation7 + $0x10] sm:$0xf]
    %v206 = vld [vmem:[#allocation7 + $0x14] sm:$0xf]
    %v207 = vld [vmem:[#allocation7 + $0x18] sm:$0xf]
    %v208 = vld [vmem:[#allocation7 + $0x1c] sm:$0xf]
    %v209 = vld [vmem:[#allocation7 + $0x20] sm:$0xf]
    %v210 = vld [vmem:[#allocation7 + $0x24] sm:$0xf]
    %v211 = vld [vmem:[#allocation7 + $0x28] sm:$0xf]
    %v212 = vld [vmem:[#allocation7 + $0x2c] sm:$0xf]
    %v213 = vld [vmem:[#allocation7 + $0x30] sm:$0xf]
    %v214 = vld [vmem:[#allocation7 + $0x34] sm:$0xf]
    %v215 = vld [vmem:[#allocation7 + $0x38] sm:$0xf]
    %v216 = vld [vmem:[#allocation7 + $0x3c] sm:$0xf]
    %v217 = vld [vmem:[#allocation7 + $0x40] sm:$0xf]
    %v218 = vld [vmem:[#allocation7 + $0x44] sm:$0xf]
    %v219 = vld [vmem:[#allocation7 + $0x48] sm:$0xf]
    %v220 = vld [vmem:[#allocation7 + $0x4c] sm:$0xf]
    %v221 = vld [vmem:[#allocation7 + $0x50] sm:$0xf]
    %v222 = vld [vmem:[#allocation7 + $0x54] sm:$0xf]
    %v223 = vld [vmem:[#allocation7 + $0x58] sm:$0xf]
    %v224 = vld [vmem:[#allocation7 + $0x5c] sm:$0xf]
    %v225 = vld [vmem:[#allocation7 + $0x60] sm:$0xf]
    %v226 = vld [vmem:[#allocation7 + $0x64] sm:$0xf]
    %v227 = vld [vmem:[#allocation7 + $0x68] sm:$0xf]
    %v228 = vld [vmem:[#allocation7 + $0x6c] sm:$0xf]
    %v229 = vld [vmem:[#allocation7 + $0x70] sm:$0xf]
    %v230 = vld [vmem:[#allocation7 + $0x74] sm:$0xf]
    %v231 = vld [vmem:[#allocation7 + $0x78] sm:$0xf]
    %v232 = vld [vmem:[#allocation7 + $0x7c] sm:$0xf]
    %v233 = vld [vmem:[#allocation7 + $0x80] sm:$0xf]
    %v234 = vld [vmem:[#allocation7 + $0x84] sm:$0xf]
    %v235 = vld [vmem:[#allocation7 + $0x88] sm:$0xf]
    %v236 = vld [vmem:[#allocation7 + $0x8c] sm:$0xf]
    %v237 = vld [vmem:[#allocation7 + $0x90] sm:$0xf]
    %v238 = vld [vmem:[#allocation7 + $0x94] sm:$0xf]
    %v239 = vld [vmem:[#allocation7 + $0x98] sm:$0xf]
    %v240 = vld [vmem:[#allocation7 + $0x9c] sm:$0xf]
    %v241 = vld [vmem:[#allocation7 + $0xa0] sm:$0xf]
    %v242 = vld [vmem:[#allocation7 + $0xa4] sm:$0xf]
    %v243 = vld [vmem:[#allocation7 + $0xa8] sm:$0xf]
    %v244 = vld [vmem:[#allocation7 + $0xac] sm:$0xf]
    %v245 = vld [vmem:[#allocation7 + $0xb0] sm:$0xf]
    %v246 = vld [vmem:[#allocation7 + $0xb4] sm:$0xf]
    %v247 = vld [vmem:[#allocation7 + $0xb8] sm:$0xf]
    %v248 = vld [vmem:[#allocation7 + $0xbc] sm:$0xf]
    %v249 = vld [vmem:[#allocation7 + $0xc0] sm:$0xf]
    %v250 = vld [vmem:[#allocation7 + $0xc4] sm:$0xf]
    %v251 = vld [vmem:[#allocation7 + $0xc8] sm:$0xf]
    %v252 = vld [vmem:[#allocation7 + $0xcc] sm:$0xf]
    %v253 = vld [vmem:[#allocation7 + $0xd0] sm:$0xf]
    %v254 = vld [vmem:[#allocation7 + $0xd4] sm:$0xf]
    %v255 = vld [vmem:[#allocation7 + $0xd8] sm:$0xf]
    %v256 = vld [vmem:[#allocation7 + $0xdc] sm:$0xf]
    %v257 = vld [vmem:[#allocation7 + $0xe0] sm:$0xf]
    %v258 = vld [vmem:[#allocation7 + $0xe4] sm:$0xf]
    %v259 = vld [vmem:[#allocation7 + $0xe8] sm:$0xf]
    %v260 = vld [vmem:[#allocation7 + $0xec] sm:$0xf]
    %v261 = vld [vmem:[#allocation7 + $0xf0] sm:$0xf]
    %v262 = vld [vmem:[#allocation7 + $0xf4] sm:$0xf]
    %v263 = vld [vmem:[#allocation7 + $0xf8] sm:$0xf]
    %v264 = vld [vmem:[#allocation7 + $0xfc] sm:$0xf]
    %v265 = vld [vmem:[%s3] sm:$0x1]
    %v267 = vperm.slane %v265, 0
    %v333 = vunpack.c.l.b16 %v201
    %v334 = vunpack.c.l.b16 %v202
    %v335 = vunpack.c.l.b16 %v203
    %v336 = vunpack.c.l.b16 %v204
    %v337 = vunpack.c.l.b16 %v205
    %v338 = vunpack.c.l.b16 %v206
    %v339 = vunpack.c.l.b16 %v207
    %v340 = vunpack.c.l.b16 %v208
    %v341 = vunpack.c.l.b16 %v209
    %v342 = vunpack.c.l.b16 %v210
    %v343 = vunpack.c.l.b16 %v211
    %v344 = vunpack.c.l.b16 %v212
    %v345 = vunpack.c.l.b16 %v213
    %v346 = vunpack.c.l.b16 %v214
    %v347 = vunpack.c.l.b16 %v215
    %v348 = vunpack.c.l.b16 %v216
    %v349 = vunpack.c.l.b16 %v217
    %v350 = vunpack.c.l.b16 %v218
    %v351 = vunpack.c.l.b16 %v219
    %v352 = vunpack.c.l.b16 %v220
    %v353 = vunpack.c.l.b16 %v221
    %v354 = vunpack.c.l.b16 %v222
    %v355 = vunpack.c.l.b16 %v223
    %v356 = vunpack.c.l.b16 %v224
    %v357 = vunpack.c.l.b16 %v225
    %v358 = vunpack.c.l.b16 %v226
    %v359 = vunpack.c.l.b16 %v227
    %v360 = vunpack.c.l.b16 %v228
    %v361 = vunpack.c.l.b16 %v229
    %v362 = vunpack.c.l.b16 %v230
    %v363 = vunpack.c.l.b16 %v231
    %v364 = vunpack.c.l.b16 %v232
    %v365 = vunpack.c.l.b16 %v233
    %v366 = vunpack.c.l.b16 %v234
    %v367 = vunpack.c.l.b16 %v235
    %v368 = vunpack.c.l.b16 %v236
    %v369 = vunpack.c.l.b16 %v237
    %v370 = vunpack.c.l.b16 %v238
    %v371 = vunpack.c.l.b16 %v239
    %v372 = vunpack.c.l.b16 %v240
    %v373 = vunpack.c.l.b16 %v241
    %v374 = vunpack.c.l.b16 %v242
    %v375 = vunpack.c.l.b16 %v243
    %v376 = vunpack.c.l.b16 %v244
    %v377 = vunpack.c.l.b16 %v245
    %v378 = vunpack.c.l.b16 %v246
    %v379 = vunpack.c.l.b16 %v247
    %v380 = vunpack.c.l.b16 %v248
    %v381 = vunpack.c.l.b16 %v249
    %v382 = vunpack.c.l.b16 %v250
    %v383 = vunpack.c.l.b16 %v251
    %v384 = vunpack.c.l.b16 %v252
    %v385 = vunpack.c.l.b16 %v253
    %v386 = vunpack.c.l.b16 %v254
    %v387 = vunpack.c.l.b16 %v255
    %v388 = vunpack.c.l.b16 %v256
    %v389 = vunpack.c.l.b16 %v257
    %v390 = vunpack.c.l.b16 %v258
    %v391 = vunpack.c.l.b16 %v259
    %v392 = vunpack.c.l.b16 %v260
    %v393 = vunpack.c.l.b16 %v261
    %v394 = vunpack.c.l.b16 %v262
    %v395 = vunpack.c.l.b16 %v263
    %v396 = vunpack.c.l.b16 %v264
    %v397 = vpack.c.b16 %v334, %v333
    %v398 = vpack.c.b16 %v336, %v335
    %v399 = vpack.c.b16 %v338, %v337
    %v400 = vpack.c.b16 %v340, %v339
    %v401 = vpack.c.b16 %v342, %v341
    %v402 = vpack.c.b16 %v344, %v343
    %v403 = vpack.c.b16 %v346, %v345
    %v404 = vpack.c.b16 %v348, %v347
    %v405 = vpack.c.b16 %v350, %v349
    %v406 = vpack.c.b16 %v352, %v351
    %v407 = vpack.c.b16 %v354, %v353
    %v408 = vpack.c.b16 %v356, %v355
    %v409 = vpack.c.b16 %v358, %v357
    %v410 = vpack.c.b16 %v360, %v359
    %v411 = vpack.c.b16 %v362, %v361
    %v412 = vpack.c.b16 %v364, %v363
    %v413 = vpack.c.b16 %v366, %v365
    %v414 = vpack.c.b16 %v368, %v367
    %v415 = vpack.c.b16 %v370, %v369
    %v416 = vpack.c.b16 %v372, %v371
    %v417 = vpack.c.b16 %v374, %v373
    %v418 = vpack.c.b16 %v376, %v375
    %v419 = vpack.c.b16 %v378, %v377
    %v420 = vpack.c.b16 %v380, %v379
    %v421 = vpack.c.b16 %v382, %v381
    %v422 = vpack.c.b16 %v384, %v383
    %v423 = vpack.c.b16 %v386, %v385
    %v424 = vpack.c.b16 %v388, %v387
    %v425 = vpack.c.b16 %v390, %v389
    %v426 = vpack.c.b16 %v392, %v391
    %v427 = vpack.c.b16 %v394, %v393
    %v428 = vpack.c.b16 %v396, %v395
    %461 = vmatpush.bf16.msra.mxu0 %v404
    %462 = vmatpush.bf16.msra.mxu0 %v403
    %463 = vmatpush.bf16.msra.mxu0 %v402
    %464 = vmatpush.bf16.msra.mxu0 %v401
    %465 = vmatpush.bf16.msra.mxu0 %v400
    %466 = vmatpush.bf16.msra.mxu0 %v399
    %467 = vmatpush.bf16.msra.mxu0 %v398
    %468 = vmatpush.bf16.msra.mxu0 %v397
    %469 = vmatmul.bf16.gmra.mxu0 %v197
    %v470 = vpop.f32.mrf.mxu0
    %v471 = vadd.f32 %v267, %v470
    %v472 = vpop.f32.mrf.mxu0
    %473 = vdwg.mxu0
    %474 = vmatpush.bf16.msra.mxu0 %v412
    %475 = vmatpush.bf16.msra.mxu0 %v411
    %476 = vmatpush.bf16.msra.mxu0 %v410
    %477 = vmatpush.bf16.msra.mxu0 %v409
    %478 = vmatpush.bf16.msra.mxu0 %v408
    %479 = vmatpush.bf16.msra.mxu0 %v407
    %480 = vmatpush.bf16.msra.mxu0 %v406
    %481 = vmatpush.bf16.msra.mxu0 %v405
    %482 = vmatmul.bf16.gmra.mxu0 %v198
    %v483 = vpop.f32.mrf.mxu0
    %v484 = vadd.f32 %v471, %v483
    %v485 = vpop.f32.mrf.mxu0
    %486 = vdwg.mxu0
    %487 = vmatpush.bf16.msra.mxu0 %v420
    %488 = vmatpush.bf16.msra.mxu0 %v419
    %489 = vmatpush.bf16.msra.mxu0 %v418
    %490 = vmatpush.bf16.msra.mxu0 %v417
    %491 = vmatpush.bf16.msra.mxu0 %v416
    %492 = vmatpush.bf16.msra.mxu0 %v415
    %493 = vmatpush.bf16.msra.mxu0 %v414
    %494 = vmatpush.bf16.msra.mxu0 %v413
    %495 = vmatmul.bf16.gmra.mxu0 %v199
    %v496 = vpop.f32.mrf.mxu0
    %v497 = vadd.f32 %v484, %v496
    %v498 = vpop.f32.mrf.mxu0
    %499 = vdwg.mxu0
    %500 = vmatpush.bf16.msra.mxu0 %v428
    %501 = vmatpush.bf16.msra.mxu0 %v427
    %502 = vmatpush.bf16.msra.mxu0 %v426
    %503 = vmatpush.bf16.msra.mxu0 %v425
    %504 = vmatpush.bf16.msra.mxu0 %v424
    %505 = vmatpush.bf16.msra.mxu0 %v423
    %506 = vmatpush.bf16.msra.mxu0 %v422
    %507 = vmatpush.bf16.msra.mxu0 %v421
    %508 = vmatmul.bf16.gmra.mxu0 %v200
    %v509 = vpop.f32.mrf.mxu0
    %v510 = vadd.f32 %v497, %v509
    %v511 = vpop.f32.mrf.mxu0
    %512 = vdwg.mxu0
    %513 = vst [vmem:[#allocation8] sm:$0xff] %v510
    // Predicated region
    $region30: #{tpu_custom_call.1} parent=1 // pred_check
      _
    $region31: #{tpu_custom_call.1} parent=1 // pred_check_branch
      %515 = sbr.rel (0) target = $region33
    $region32: #{tpu_custom_call.1} parent=1 // pred_region
      %517 = vsyncadd [#allocation4], 0
      %s519 = sshll.u32 [#allocation8], 4
      %s520 = int_to_ptr.vmem [resolvable:$true] %s519
      %s521 = sshll.u32 %s4, 4
      %s522 = int_to_ptr.hbm [resolvable:$true] %s521
      %524 = dma.vmem_to_hbm [thread:$0]  %s520, 128, %s522, [#allocation4]
    $region33: #{tpu_custom_call.1} parent=1 // pred_fallthru
      _
    // Predicated region
    $region34: #{tpu_custom_call.1} parent=1 // pred_check
      _
    $region35: #{tpu_custom_call.1} parent=1 // pred_check_branch
      %526 = sbr.rel (0) target = $region37
    $region36: #{tpu_custom_call.1} parent=1 // pred_region
      %528 = dma.done [#allocation4], 128
    $region37: #{tpu_custom_call.1} parent=1 // pred_fallthru
      _
    %529 = vsyncpa [#allocation3], 1
    %530 = vsyncpa [#allocation6], 1
    %531 = vsyncpa [#allocation4], 1

</llo_original>
